<compile_context>
chip_gen: v6e
topology: v6e:2x2x1
jax: 0.10.0
libtpu: 0.0.40
codegen_flags: <defaults>
</compile_context>

<pallas_src>
import functools

import jax
import jax.numpy as jnp
from jax.experimental import pallas as pl
from jax.experimental.pallas import tpu as pltpu


def _restriction_kernel(x_ref, o_ref, *, scale, bias):
    # y = scale * tanh(x) + bias, bias = scale + offset (the "+1" is folded in).
    x = x_ref[...].astype(jnp.float32)
    o_ref[...] = (scale * jnp.tanh(x) + bias).astype(o_ref.dtype)


def _min_sublane(dtype):
    # Minimum packed sublane tile: 8 rows for 32-bit, 16 for bf16, 32 for 8-bit.
    itemsize = jnp.dtype(dtype).itemsize
    return max(8, 32 // itemsize)


def _pick_cols(total):
    # Widest lane-dense column count that divides the element count exactly.
    for cols in (2048, 1024, 512, 256, 128):
        if total % cols == 0:
            return cols
    return None


def _run_2d(x2d, scale, bias, *,
            target_block_bytes=2 * 1024 * 1024,
            vmem_limit_bytes=32 * 1024 * 1024):
    rows, cols = x2d.shape
    dtype = x2d.dtype
    itemsize = jnp.dtype(dtype).itemsize
    sub = _min_sublane(dtype)

    if rows % sub != 0:
        # Only reached for small slabs (wrapper guarantees it fits VMEM):
        # use the full-extent block, which is always a legal block shape.
        block_rows = rows
    else:
        block_rows = max(sub, target_block_bytes // (cols * itemsize))
        block_rows = (block_rows // sub) * sub
        block_rows = min(block_rows, rows)

    grid = (pl.cdiv(rows, block_rows),)
    total = rows * cols
    cost = pl.CostEstimate(
        flops=2 * total,                       # mul + add per element
        transcendentals=total,                 # one tanh per element (EUP)
        bytes_accessed=2 * total * itemsize,   # read + write
    )

    kernel = functools.partial(_restriction_kernel, scale=scale, bias=bias)
    return pl.pallas_call(
        kernel,
        out_shape=jax.ShapeDtypeStruct((rows, cols), dtype),
        grid_spec=pltpu.PrefetchScalarGridSpec(
            num_scalar_prefetch=0,
            grid=grid,
            in_specs=[pl.BlockSpec((block_rows, cols), lambda i: (i, 0))],
            out_specs=pl.BlockSpec((block_rows, cols), lambda i: (i, 0)),
        ),
        compiler_params=pltpu.CompilerParams(
            dimension_semantics=("parallel",),
            vmem_limit_bytes=vmem_limit_bytes,
        ),
        cost_estimate=cost,
    )(x2d)


def restriction_activation(x, min_value=0.0, max_value=1.0):
    """y = scale*(tanh(x)+1) + offset, elementwise. Any shape (e.g. NCHW)."""
    scale = (max_value - min_value) / 2.0
    bias = scale + float(min_value)   # scale*(tanh+1)+offset == scale*tanh + bias

    orig_shape = x.shape
    dtype = x.dtype
    itemsize = jnp.dtype(dtype).itemsize
    total = x.size
    sub = _min_sublane(dtype)

    cols = _pick_cols(total)
    if cols is not None:
        rows = total // cols
        # Copy-free path: either the rows tile cleanly on sublanes, or the
        # whole slab is small enough to be a single full-extent block.
        if rows % sub == 0 or rows * cols * itemsize <= 4 * 1024 * 1024:
            out2d = _run_2d(x.reshape(rows, cols), scale, bias)
            return out2d.reshape(orig_shape)

    # Fallback (rarely hit): pad flat buffer to a (sub-multiple rows, 512)
    # slab, run, then slice. Padded tail is discarded by the slice, so the
    # fact that tanh(0) maps to `bias` there is harmless.
    COLS = 512
    rows = pl.cdiv(total, COLS)
    rows = pl.cdiv(rows, sub) * sub
    padded = rows * COLS
    x_flat = jnp.pad(x.reshape(-1), (0, padded - total))
    out2d = _run_2d(x_flat.reshape(rows, COLS), scale, bias)
    return out2d.reshape(-1)[:total].reshape(orig_shape)


if __name__ == "__main__":
    key = jax.random.PRNGKey(0)
    # Small NCHW input consistent with typical use of this activation.
    x = jax.random.normal(key, (2, 4, 16, 16), dtype=jnp.float32) * 3.0

    min_value, max_value = 0.0, 1.0
    y = restriction_activation(x, min_value=min_value, max_value=max_value)
    y = jax.block_until_ready(y)

    # Reference (plain JAX) check.
    scale = (max_value - min_value) / 2.0
    y_ref = scale * (jnp.tanh(x) + 1.0) + min_value
    assert y.shape == x.shape and y.dtype == x.dtype
    assert jnp.allclose(y, y_ref, atol=1e-6, rtol=1e-6)

    print("KERNEL_OK")
</pallas_src>

<mosaic_0001>
module attributes {stable_mosaic.version = 11 : i64} {
  func.func @_restriction_kernel(%arg0: i32, %arg1: memref<1x2048xf32, #tpu.memory_space<vmem>>, %arg2: memref<1x2048xf32, #tpu.memory_space<vmem>>) attributes {dimension_semantics = [#tpu.dimension_semantics<parallel>], iteration_bounds = array<i64: 1>, scalar_prefetch = 0 : i64, scratch_operands = 0 : i64, tpu.core_type = #tpu.core_type<tc>, window_params = [{transform_indices = @transform_0, window_bounds = array<i64: 1, 2048>}, {transform_indices = @transform_1, window_bounds = array<i64: 1, 2048>}]} {
    %c0 = arith.constant 0 : index
    %c0_0 = arith.constant 0 : index
    %0 = vector.load %arg1[%c0, %c0_0] : memref<1x2048xf32, #tpu.memory_space<vmem>>, vector<1x2048xf32>
    %1 = math.tanh %0 : vector<1x2048xf32>
    %cst = arith.constant 5.000000e-01 : f32
    %2 = vector.broadcast %cst : f32 to vector<1x2048xf32>
    %3 = arith.mulf %2, %1 : vector<1x2048xf32>
    %cst_1 = arith.constant 5.000000e-01 : f32
    %4 = vector.broadcast %cst_1 : f32 to vector<1x2048xf32>
    %5 = arith.addf %3, %4 : vector<1x2048xf32>
    %c0_2 = arith.constant 0 : index
    %c0_3 = arith.constant 0 : index
    %6 = vector.load %arg2[%c0_2, %c0_3] : memref<1x2048xf32, #tpu.memory_space<vmem>>, vector<1x2048xf32>
    tpu.vector_store %arg2[%c0_2, %c0_3], %5 {strides = array<i32>} : memref<1x2048xf32, #tpu.memory_space<vmem>>, vector<1x2048xf32>,
    return
  }
  func.func @transform_0(%arg0: i32) -> (i32, i32) {
    %c0_i32 = arith.constant 0 : i32
    %c0_i32_0 = arith.constant 0 : i32
    return %arg0, %c0_i32 : i32, i32
  }
  func.func @transform_1(%arg0: i32) -> (i32, i32) {
    %c0_i32 = arith.constant 0 : i32
    %c0_i32_0 = arith.constant 0 : i32
    return %arg0, %c0_i32 : i32, i32
  }
}

</mosaic_0001>

<llo_original>
// kernel: tpu_custom_call.1
$region0: #{tpu_custom_call.1}
  #allocation0 [shape = 'u32[]', space=smem, size = 0x4, offset = 0x4, fixed_abs, tag = 'smem constant byte address 0x4 - core index']
  #allocation1 [shape = 'u32[144,128]{1,0:T(1,128)}', space=vmem, size = 0x12000, scoped, tag = 'internal scratch']
  %s0 = inlined_call_operand.hbm [shape: f32[1,2048], index: 0, kind: input, shape index: {}]
  %s1 = inlined_call_operand.hbm [shape: f32[1,2048], index: 1, kind: output, shape index: {}]
  %s2 = sld [smem:[#allocation0]]
  $region18: #{tpu_custom_call.1} parent=0
    _
  %s4 = ssub.s32 1, %s2
  %s5 = scalar_select 0, %s4, %s2
  $region1: #{tpu_custom_call.1} parent=0
    #allocation2 [shape = 'u8[8192]{0}', space=vmem, size = 0x2000, scoped, tag = 'input window, operand 0, single buffered']
    #allocation3 [shape = 's32[1]{0}', space=sflag, size = 0x4, scoped, tag = 'scoped memory for tpu_custom_call.1']
    #allocation4 [shape = 's32[1]{0}', space=sflag, size = 0x4, scoped, tag = 'scoped memory for tpu_custom_call.1']
    #allocation5 [shape = 'u8[8192]{0}', space=vmem, size = 0x2000, scoped, tag = 'output window, operand 0, single buffered']
    %6 = vsyncpa [#allocation3], 0
    %7 = vsyncpa [#allocation4], 0
    // Predicated region
    $region2: #{tpu_custom_call.1} parent=1 // pred_check
      _
    $region3: #{tpu_custom_call.1} parent=1 // pred_check_branch
      %9 = sbr.rel (0) target = $region5
    $region4: #{tpu_custom_call.1} parent=1 // pred_region
      %s11 = ssub.s32 256, 256
      %12 = vsyncadd [#allocation3], %s11
      %s14 = sshll.u32 [#allocation2], 4
      %s15 = int_to_ptr.vmem [resolvable:$true] %s14
      %17 = dma.hbm_to_vmem [thread:$0]  %s0, 256, %s15, [#allocation3]
    $region5: #{tpu_custom_call.1} parent=1 // pred_fallthru
      _
    // Predicated region
    $region6: #{tpu_custom_call.1} parent=1 // pred_check
      _
    $region7: #{tpu_custom_call.1} parent=1 // pred_check_branch
      %19 = sbr.rel (0) target = $region9
    $region8: #{tpu_custom_call.1} parent=1 // pred_region
      %20 = dma.done [#allocation3], 256
    $region9: #{tpu_custom_call.1} parent=1 // pred_fallthru
      _
    %v21 = vld [vmem:[#allocation2] sm:$0xff]
    %v22 = vld [vmem:[#allocation2 + $0x8] sm:$0xff]
    %v23 = vtanh.pop %v21
    %v24 = vtanh.pop %v22
    %v25 = vmul.f32 %v23, 0.5
    %v26 = vmul.f32 %v24, 0.5
    %v27 = vadd.f32 %v25, 0.5
    %v28 = vadd.f32 %v26, 0.5
    %29 = vst [vmem:[#allocation5] sm:$0xff] %v27
    %30 = vst [vmem:[#allocation5 + $0x8] sm:$0xff] %v28
    // Predicated region
    $region10: #{tpu_custom_call.1} parent=1 // pred_check
      _
    $region11: #{tpu_custom_call.1} parent=1 // pred_check_branch
      %32 = sbr.rel (0) target = $region13
    $region12: #{tpu_custom_call.1} parent=1 // pred_region
      %s34 = ssub.s32 256, 256
      %35 = vsyncadd [#allocation4], %s34
      %s37 = sshll.u32 [#allocation5], 4
      %s38 = int_to_ptr.vmem [resolvable:$true] %s37
      %40 = dma.vmem_to_hbm [thread:$0]  %s38, 256, %s1, [#allocation4]
    $region13: #{tpu_custom_call.1} parent=1 // pred_fallthru
      _
    // Predicated region
    $region14: #{tpu_custom_call.1} parent=1 // pred_check
      _
    $region15: #{tpu_custom_call.1} parent=1 // pred_check_branch
      %42 = sbr.rel (0) target = $region17
    $region16: #{tpu_custom_call.1} parent=1 // pred_region
      %43 = dma.done [#allocation4], 256
    $region17: #{tpu_custom_call.1} parent=1 // pred_fallthru
      _
    %44 = vsyncpa [#allocation3], 1
    %45 = vsyncpa [#allocation4], 1

</llo_original>
